<compile_context>
chip_gen: v6e
topology: v6e:2x2x1
jax: 0.10.0
libtpu: 0.0.40
codegen_flags: <defaults>
</compile_context>

<pallas_src>
import jax
import jax.numpy as jnp
from jax.experimental import pallas as pl
from jax.experimental.pallas import tpu as pltpu

LANE = 128
SUBLANE = 8


def _round_up(x, m):
    return (x + m - 1) // m * m


# ---------------------------------------------------------------------------
# Kernel
# ---------------------------------------------------------------------------
def node_embedding_kernel(idx_ref, table_ref, out_ref):
    # idx_ref   : (TILE_N, 5)       int32 - indices pre-offset into the fused
    #                                       block-diagonal table's row space.
    # table_ref : (V_pad, OUT_PAD)  f32/bf16 - fused block-diagonal table,
    #                                       whole-array resident in VMEM.
    # out_ref   : (TILE_N, OUT_PAD) f32   - OUT_PAD % 128 == 0 -> lane-dense.
    idx = idx_ref[...]
    tile_n, n_fields = idx.shape
    v_pad = table_ref.shape[0]

    # Multi-hot over the fused row space. Sub-table row ranges are disjoint,
    # so OR-ing the per-field one-hots is exact; a single cast at the end
    # keeps the build boolean (fewer VALU passes than per-field convert+add).
    iota = jax.lax.broadcasted_iota(jnp.int32, (tile_n, v_pad), 1)
    hot = idx[:, 0:1] == iota
    for c in range(1, n_fields):
        hot = jnp.logical_or(hot, idx[:, c:c + 1] == iota)

    table = table_ref[...]
    multi_hot = hot.astype(table.dtype)

    # Single MXU pass; the block-diagonal layout makes this exactly the
    # concatenation of the 5 lookups along the lane axis.  (For guaranteed
    # bit-exact gather semantics pass precision=jax.lax.Precision.HIGHEST;
    # default f32 matmul precision already satisfies atol=1e-5.)
    emb = jnp.dot(multi_hot, table, preferred_element_type=jnp.float32)

    # One unmasked, lane-dense store of the whole (TILE_N, OUT_PAD) tile.
    out_ref[...] = emb.astype(out_ref.dtype)


# ---------------------------------------------------------------------------
# Parameter-init time: fuse the 5 tables ONCE (not per forward call).
# ---------------------------------------------------------------------------
def init_node_embedding_params(tables, *, use_bf16_table=False):
    """Build the block-diagonal fused table once.

    Returns (fused_table [V_pad, OUT_PAD], row_offsets, table_sizes, embed_dim).
    """
    n_fields = len(tables)
    d = int(tables[0].shape[1])
    out_dim = n_fields * d
    out_dim_pad = _round_up(out_dim, LANE)          # 160 -> 256: lane-dense out

    sizes, offsets, off = [], [], 0
    for t in tables:
        sizes.append(int(t.shape[0]))
        offsets.append(off)
        off += int(t.shape[0])
    v_total = off
    v_pad = _round_up(v_total, LANE)                # lane-align matmul K dim

    dtype = jnp.bfloat16 if use_bf16_table else jnp.float32
    blocks = []
    for i, t in enumerate(tables):
        left = i * d
        right = out_dim_pad - left - d
        blocks.append(jnp.pad(t.astype(dtype), ((0, 0), (left, right))))
    if v_pad != v_total:
        blocks.append(jnp.zeros((v_pad - v_total, out_dim_pad), dtype))
    fused = jnp.concatenate(blocks, axis=0)         # single concat of padded blocks
    return fused, tuple(offsets), tuple(sizes), d


# ---------------------------------------------------------------------------
# Per-generation tiling / VMEM budget
# ---------------------------------------------------------------------------
def _pick_tile_n(n_rows):
    if n_rows <= 128:
        return _round_up(max(n_rows, 1), SUBLANE)
    try:
        kind = jax.devices()[0].device_kind.lower()
    except Exception:
        kind = ""
    if "v7" in kind:
        # 2 TensorCores: keep >=2 grid steps so ("parallel",) actually shards.
        return 256 if n_rows >= 512 else 128
    if "v6" in kind:
        # 2x256^2 MXU: M=256 fills a full systolic pass.
        return 256 if n_rows >= 256 else 128
    # v5e (4x128^2 MXU, single vst slot): 128 already fills a pass.
    return 128


def _vmem_budget_bytes(tile_n, v_pad, out_dim_pad, table_itemsize):
    f32 = 4
    idx_bytes = 2 * tile_n * LANE * f32               # double-buffered index tile
    out_bytes = 2 * tile_n * out_dim_pad * f32        # double-buffered output tile
    tab_bytes = v_pad * out_dim_pad * table_itemsize  # single resident table copy
    tmp_bytes = 2 * tile_n * v_pad * f32              # multi-hot + matmul staging
    total = idx_bytes + out_bytes + tab_bytes + tmp_bytes
    return int(min(64 * 1024 * 1024, max(4 * 1024 * 1024, 2 * total)))


# ---------------------------------------------------------------------------
# Forward (Pallas equivalent of NodeEmbedding.forward: concat of 5 lookups)
# ---------------------------------------------------------------------------
def node_embedding(categories, sub_categories, elements, brands, product_ids,
                   fused_table, row_offsets, table_sizes, embedding_dim):
    indices = [categories, sub_categories, elements, brands, product_ids]
    n_fields = len(indices)
    out_dim = n_fields * embedding_dim
    v_pad, out_dim_pad = fused_table.shape
    N = categories.shape[0]

    # Pack + clamp + offset the 5 index streams into one (N_pad, 5) i32 array
    # (equivalent of .long(); clamp replaces torch's OOB error rather than
    # silently emitting an all-zero row).
    cols = []
    for i, idx in enumerate(indices):
        idx = jnp.clip(idx.astype(jnp.int32), 0, table_sizes[i] - 1)
        cols.append(idx + row_offsets[i])
    packed = jnp.stack(cols, axis=1)                  # (N, 5)

    tile_n = _pick_tile_n(N)
    n_pad = _round_up(N, tile_n)
    if n_pad != N:
        # Edge-replicate so padded rows stay valid per-field one-hot lookups.
        packed = jnp.pad(packed, ((0, n_pad - N), (0, 0)), mode="edge")
    grid = (n_pad // tile_n,)

    out = pl.pallas_call(
        node_embedding_kernel,
        out_shape=jax.ShapeDtypeStruct((n_pad, out_dim_pad), jnp.float32),
        grid=grid,
        in_specs=[
            # Packed indices: pipelined over the batch grid.
            pl.BlockSpec((tile_n, n_fields), lambda i: (i, 0)),
            # Fused table: one whole-array copy resident in VMEM (constant
            # across the grid -> no double-buffering of the padded table).
            pl.BlockSpec(memory_space=pltpu.MemorySpace.VMEM),
        ],
        out_specs=pl.BlockSpec((tile_n, out_dim_pad), lambda i: (i, 0)),
        compiler_params=pltpu.CompilerParams(
            dimension_semantics=("parallel",),
            vmem_limit_bytes=_vmem_budget_bytes(
                tile_n, v_pad, out_dim_pad, fused_table.dtype.itemsize),
        ),
    )(packed, fused_table)

    return out[:N, :out_dim]


def reference(categories, sub_categories, elements, brands, product_ids,
              cat_tab, sub_tab, elem_tab, brand_tab, prod_tab):
    return jnp.concatenate(
        [cat_tab[categories], sub_tab[sub_categories], elem_tab[elements],
         brand_tab[brands], prod_tab[product_ids]], axis=1)


if __name__ == "__main__":
    key = jax.random.PRNGKey(0)
    ks = jax.random.split(key, 10)

    # Module hyperparameters (small, synthetic).
    num_categories, num_sub_categories = 8, 12
    num_elements, num_brands, num_items = 10, 16, 32
    embedding_dim = 32
    N = 8  # number of nodes in the batch

    # Deterministic "parameters" (torch.nn.Embedding weights ~ N(0,1)).
    cat_tab   = jax.random.normal(ks[0], (num_categories,     embedding_dim), jnp.float32)
    sub_tab   = jax.random.normal(ks[1], (num_sub_categories, embedding_dim), jnp.float32)
    elem_tab  = jax.random.normal(ks[2], (num_elements,       embedding_dim), jnp.float32)
    brand_tab = jax.random.normal(ks[3], (num_brands,         embedding_dim), jnp.float32)
    prod_tab  = jax.random.normal(ks[4], (num_items,          embedding_dim), jnp.float32)

    # Deterministic example inputs (index vectors of shape [N]).
    categories     = jax.random.randint(ks[5], (N,), 0, num_categories,     jnp.int32)
    sub_categories = jax.random.randint(ks[6], (N,), 0, num_sub_categories, jnp.int32)
    elements       = jax.random.randint(ks[7], (N,), 0, num_elements,       jnp.int32)
    brands         = jax.random.randint(ks[8], (N,), 0, num_brands,         jnp.int32)
    product_ids    = jax.random.randint(ks[9], (N,), 0, num_items,          jnp.int32)

    # Parameter-init time: fuse the 5 tables ONCE (not in the per-call path).
    fused_table, row_offsets, table_sizes, d = init_node_embedding_params(
        [cat_tab, sub_tab, elem_tab, brand_tab, prod_tab], use_bf16_table=False)
    fused_table = jax.block_until_ready(fused_table)

    out = node_embedding(categories, sub_categories, elements, brands, product_ids,
                         fused_table, row_offsets, table_sizes, d)
    out = jax.block_until_ready(out)

    ref = reference(categories, sub_categories, elements, brands, product_ids,
                    cat_tab, sub_tab, elem_tab, brand_tab, prod_tab)
    assert out.shape == (N, 5 * embedding_dim), out.shape
    assert jnp.allclose(out, ref, atol=1e-5), "mismatch vs reference"

    print("KERNEL_OK")
</pallas_src>

<mosaic_0001>
module attributes {stable_mosaic.version = 11 : i64} {
  func.func @node_embedding_kernel(%arg0: i32, %arg1: memref<8x5xi32, #tpu.memory_space<vmem>>, %arg2: memref<128x256xf32, #tpu.memory_space<vmem>>, %arg3: memref<8x256xf32, #tpu.memory_space<vmem>>) attributes {dimension_semantics = [#tpu.dimension_semantics<parallel>], iteration_bounds = array<i64: 1>, scalar_prefetch = 0 : i64, scratch_operands = 0 : i64, tpu.core_type = #tpu.core_type<tc>, window_params = [{transform_indices = @transform_0, window_bounds = array<i64: 8, 5>}, {pipeline_mode = #tpu.pipeline_mode<synchronous>, transform_indices = @transform_1, window_bounds = array<i64: 128, 256>}, {transform_indices = @transform_2, window_bounds = array<i64: 8, 256>}]} {
    %c0 = arith.constant 0 : index
    %c0_0 = arith.constant 0 : index
    %0 = vector.load %arg1[%c0, %c0_0] : memref<8x5xi32, #tpu.memory_space<vmem>>, vector<8x5xi32>
    %1 = tpu.iota {dimensions = array<i32: 1>} : vector<8x128xi32>
    %2 = vector.extract_strided_slice %0 {offsets = [0, 0], sizes = [8, 1], strides = [1, 1]} : vector<8x5xi32> to vector<8x1xi32>
    %3 = vector.broadcast %2 : vector<8x1xi32> to vector<8x128xi32>
    %4 = arith.cmpi eq, %3, %1 : vector<8x128xi32>
    %5 = vector.extract_strided_slice %0 {offsets = [0, 1], sizes = [8, 1], strides = [1, 1]} : vector<8x5xi32> to vector<8x1xi32>
    %6 = vector.broadcast %5 : vector<8x1xi32> to vector<8x128xi32>
    %7 = arith.cmpi eq, %6, %1 : vector<8x128xi32>
    %8 = arith.ori %4, %7 : vector<8x128xi1>
    %9 = vector.extract_strided_slice %0 {offsets = [0, 2], sizes = [8, 1], strides = [1, 1]} : vector<8x5xi32> to vector<8x1xi32>
    %10 = vector.broadcast %9 : vector<8x1xi32> to vector<8x128xi32>
    %11 = arith.cmpi eq, %10, %1 : vector<8x128xi32>
    %12 = arith.ori %8, %11 : vector<8x128xi1>
    %13 = vector.extract_strided_slice %0 {offsets = [0, 3], sizes = [8, 1], strides = [1, 1]} : vector<8x5xi32> to vector<8x1xi32>
    %14 = vector.broadcast %13 : vector<8x1xi32> to vector<8x128xi32>
    %15 = arith.cmpi eq, %14, %1 : vector<8x128xi32>
    %16 = arith.ori %12, %15 : vector<8x128xi1>
    %17 = vector.extract_strided_slice %0 {offsets = [0, 4], sizes = [8, 1], strides = [1, 1]} : vector<8x5xi32> to vector<8x1xi32>
    %18 = vector.broadcast %17 : vector<8x1xi32> to vector<8x128xi32>
    %19 = arith.cmpi eq, %18, %1 : vector<8x128xi32>
    %20 = arith.ori %16, %19 : vector<8x128xi1>
    %c0_1 = arith.constant 0 : index
    %c0_2 = arith.constant 0 : index
    %21 = vector.load %arg2[%c0_1, %c0_2] : memref<128x256xf32, #tpu.memory_space<vmem>>, vector<128x256xf32>
    %22 = arith.extui %20 : vector<8x128xi1> to vector<8x128xi32>
    %23 = arith.sitofp %22 : vector<8x128xi32> to vector<8x128xf32>
    %cst = arith.constant dense<0.000000e+00> : vector<8x256xf32>
    %24 = tpu.matmul %23, %21, %cst {dimension_numbers = #tpu.dot_dimension_numbers<[1], [0], [0], [1], [0, 0, 1, 1], [], []>} : vector<8x128xf32>, vector<128x256xf32>, vector<8x256xf32> -> vector<8x256xf32>
    %c0_3 = arith.constant 0 : index
    %c0_4 = arith.constant 0 : index
    %25 = vector.load %arg3[%c0_3, %c0_4] : memref<8x256xf32, #tpu.memory_space<vmem>>, vector<8x256xf32>
    tpu.vector_store %arg3[%c0_3, %c0_4], %24 {strides = array<i32>} : memref<8x256xf32, #tpu.memory_space<vmem>>, vector<8x256xf32>,
    return
  }
  func.func @transform_0(%arg0: i32) -> (i32, i32) {
    %c0_i32 = arith.constant 0 : i32
    %c0_i32_0 = arith.constant 0 : i32
    return %arg0, %c0_i32 : i32, i32
  }
  func.func @transform_1(%arg0: i32) -> (i32, i32) {
    %c0_i32 = arith.constant 0 : i32
    %c0_i32_0 = arith.constant 0 : i32
    %c0_i32_1 = arith.constant 0 : i32
    return %c0_i32, %c0_i32_0 : i32, i32
  }
  func.func @transform_2(%arg0: i32) -> (i32, i32) {
    %c0_i32 = arith.constant 0 : i32
    %c0_i32_0 = arith.constant 0 : i32
    return %arg0, %c0_i32 : i32, i32
  }
}

</mosaic_0001>

<llo_original>
// kernel: tpu_custom_call.1
$region0: #{tpu_custom_call.1}
  #allocation0 [shape = 'u32[]', space=smem, size = 0x4, offset = 0x4, fixed_abs, tag = 'smem constant byte address 0x4 - core index']
  #allocation1 [shape = 'u32[144,128]{1,0:T(1,128)}', space=vmem, size = 0x12000, scoped, tag = 'internal scratch']
  %s0 = inlined_call_operand.hbm [shape: s32[8,5], index: 0, kind: input, shape index: {}]
  %s1 = inlined_call_operand.hbm [shape: f32[128,256], index: 1, kind: input, shape index: {}]
  %s2 = inlined_call_operand.hbm [shape: f32[8,256], index: 2, kind: output, shape index: {}]
  %s3 = sld [smem:[#allocation0]]
  $region26: #{tpu_custom_call.1} parent=0
    _
  %s5 = ssub.s32 1, %s3
  %s6 = scalar_select 0, %s5, %s3
  $region1: #{tpu_custom_call.1} parent=0
    #allocation2 [shape = 'u8[4096]{0}', space=vmem, size = 0x1000, scoped, tag = 'input window, operand 0, single buffered']
    #allocation3 [shape = 's32[1]{0}', space=sflag, size = 0x4, scoped, tag = 'scoped memory for tpu_custom_call.1']
    #allocation4 [shape = 's32[1]{0}', space=sflag, size = 0x4, scoped, tag = 'scoped memory for tpu_custom_call.1']
    #allocation5 [shape = 'u8[131072]{0}', space=vmem, size = 0x20000, scoped, tag = 'input window, operand 1, single buffered']
    #allocation6 [shape = 's32[1]{0}', space=sflag, size = 0x4, scoped, tag = 'scoped memory for tpu_custom_call.1']
    #allocation7 [shape = 'u8[8192]{0}', space=vmem, size = 0x2000, scoped, tag = 'output window, operand 0, single buffered']
    %7 = vsyncpa [#allocation3], 0
    %8 = vsyncpa [#allocation6], 0
    %9 = vsyncpa [#allocation4], 0
    // Predicated region
    $region2: #{tpu_custom_call.1} parent=1 // pred_check
      _
    $region3: #{tpu_custom_call.1} parent=1 // pred_check_branch
      %11 = sbr.rel (0) target = $region5
    $region4: #{tpu_custom_call.1} parent=1 // pred_region
      %s13 = ssub.s32 128, 128
      %14 = vsyncadd [#allocation3], %s13
      %s16 = sshll.u32 [#allocation2], 4
      %s17 = int_to_ptr.vmem [resolvable:$true] %s16
      %19 = dma.hbm_to_vmem [thread:$0]  %s0, 128, %s17, [#allocation3]
    $region5: #{tpu_custom_call.1} parent=1 // pred_fallthru
      _
    // Predicated region
    $region6: #{tpu_custom_call.1} parent=1 // pred_check
      _
    $region7: #{tpu_custom_call.1} parent=1 // pred_check_branch
      %21 = sbr.rel (0) target = $region9
    $region8: #{tpu_custom_call.1} parent=1 // pred_region
      %s23 = ssub.s32 4096, 4096
      %24 = vsyncadd [#allocation6], %s23
      %s25 = sshll.u32 [#allocation5], 4
      %s26 = int_to_ptr.vmem [resolvable:$true] %s25
      %31 = dma.hbm_to_vmem [thread:$0]  %s1, 4096, %s26, [#allocation6], 256, 256, 16
    $region9: #{tpu_custom_call.1} parent=1 // pred_fallthru
      _
    // Predicated region
    $region10: #{tpu_custom_call.1} parent=1 // pred_check
      _
    $region11: #{tpu_custom_call.1} parent=1 // pred_check_branch
      %33 = sbr.rel (0) target = $region13
    $region12: #{tpu_custom_call.1} parent=1 // pred_region
      %34 = dma.done [#allocation3], 128
    $region13: #{tpu_custom_call.1} parent=1 // pred_fallthru
      _
    // Predicated region
    $region14: #{tpu_custom_call.1} parent=1 // pred_check
      _
    $region15: #{tpu_custom_call.1} parent=1 // pred_check_branch
      %36 = sbr.rel (0) target = $region17
    $region16: #{tpu_custom_call.1} parent=1 // pred_region
      %37 = dma.done [#allocation6], 4096
    $region17: #{tpu_custom_call.1} parent=1 // pred_fallthru
      _
    %v38 = vld [vmem:[#allocation2] sm:$0xff]
    %v39 = vlaneseq
    %v40 = vand.u32 %v39, 127
    %41 = vset.pattern.permute.xlu0 0
    %42 = vperm.xlu0 %41, %v38
    %v43 = vpop.permute.xlu0 %42
    %vm44 = vcmp.eq.s32.totalorder %v43, %v40
    %45 = vset.pattern.permute.xlu0 1
    %46 = vperm.xlu0 %45, %v38
    %v47 = vpop.permute.xlu0 %46
    %vm48 = vcmp.eq.s32.totalorder %v47, %v40
    %vm49 = vmor %vm44, %vm48
    %50 = vset.pattern.permute.xlu0 2
    %51 = vperm.xlu0 %50, %v38
    %v52 = vpop.permute.xlu0 %51
    %vm53 = vcmp.eq.s32.totalorder %v52, %v40
    %vm54 = vmor %vm49, %vm53
    %55 = vset.pattern.permute.xlu0 3
    %56 = vperm.xlu0 %55, %v38
    %v57 = vpop.permute.xlu0 %56
    %vm58 = vcmp.eq.s32.totalorder %v57, %v40
    %vm59 = vmor %vm54, %vm58
    %60 = vset.pattern.permute.xlu0 4
    %61 = vperm.xlu0 %60, %v38
    %v62 = vpop.permute.xlu0 %61
    %vm63 = vcmp.eq.s32.totalorder %v62, %v40
    %vm64 = vmor %vm59, %vm63
    %v65 = vld [vmem:[#allocation5] sm:$0xff]
    %v66 = vld [vmem:[#allocation5 + $0x8] sm:$0xff]
    %v67 = vld [vmem:[#allocation5 + $0x10] sm:$0xff]
    %v68 = vld [vmem:[#allocation5 + $0x18] sm:$0xff]
    %v69 = vld [vmem:[#allocation5 + $0x20] sm:$0xff]
    %v70 = vld [vmem:[#allocation5 + $0x28] sm:$0xff]
    %v71 = vld [vmem:[#allocation5 + $0x30] sm:$0xff]
    %v72 = vld [vmem:[#allocation5 + $0x38] sm:$0xff]
    %v73 = vld [vmem:[#allocation5 + $0x40] sm:$0xff]
    %v74 = vld [vmem:[#allocation5 + $0x48] sm:$0xff]
    %v75 = vld [vmem:[#allocation5 + $0x50] sm:$0xff]
    %v76 = vld [vmem:[#allocation5 + $0x58] sm:$0xff]
    %v77 = vld [vmem:[#allocation5 + $0x60] sm:$0xff]
    %v78 = vld [vmem:[#allocation5 + $0x68] sm:$0xff]
    %v79 = vld [vmem:[#allocation5 + $0x70] sm:$0xff]
    %v80 = vld [vmem:[#allocation5 + $0x78] sm:$0xff]
    %v81 = vld [vmem:[#allocation5 + $0x80] sm:$0xff]
    %v82 = vld [vmem:[#allocation5 + $0x88] sm:$0xff]
    %v83 = vld [vmem:[#allocation5 + $0x90] sm:$0xff]
    %v84 = vld [vmem:[#allocation5 + $0x98] sm:$0xff]
    %v85 = vld [vmem:[#allocation5 + $0xa0] sm:$0xff]
    %v86 = vld [vmem:[#allocation5 + $0xa8] sm:$0xff]
    %v87 = vld [vmem:[#allocation5 + $0xb0] sm:$0xff]
    %v88 = vld [vmem:[#allocation5 + $0xb8] sm:$0xff]
    %v89 = vld [vmem:[#allocation5 + $0xc0] sm:$0xff]
    %v90 = vld [vmem:[#allocation5 + $0xc8] sm:$0xff]
    %v91 = vld [vmem:[#allocation5 + $0xd0] sm:$0xff]
    %v92 = vld [vmem:[#allocation5 + $0xd8] sm:$0xff]
    %v93 = vld [vmem:[#allocation5 + $0xe0] sm:$0xff]
    %v94 = vld [vmem:[#allocation5 + $0xe8] sm:$0xff]
    %v95 = vld [vmem:[#allocation5 + $0xf0] sm:$0xff]
    %v96 = vld [vmem:[#allocation5 + $0xf8] sm:$0xff]
    %v97 = vsel %vm64, 1, 0
    %v98 = vcvt.s32.f32 %v97
    %99 = vmatprep.subr.mxu0 %v96
    %100 = vmatpush1.msra.mxu0 %v95
    %101 = vmatprep.subr.mxu0 %v94
    %102 = vmatpush1.msra.mxu0 %v93
    %103 = vmatprep.subr.mxu0 %v92
    %104 = vmatpush1.msra.mxu0 %v91
    %105 = vmatprep.subr.mxu0 %v90
    %106 = vmatpush1.msra.mxu0 %v89
    %107 = vmatprep.subr.mxu0 %v88
    %108 = vmatpush1.msra.mxu0 %v87
    %109 = vmatprep.subr.mxu0 %v86
    %110 = vmatpush1.msra.mxu0 %v85
    %111 = vmatprep.subr.mxu0 %v84
    %112 = vmatpush1.msra.mxu0 %v83
    %113 = vmatprep.subr.mxu0 %v82
    %114 = vmatpush1.msra.mxu0 %v81
    %115 = vmatprep.subr.mxu0 %v80
    %116 = vmatpush1.msra.mxu0 %v79
    %117 = vmatprep.subr.mxu0 %v78
    %118 = vmatpush1.msra.mxu0 %v77
    %119 = vmatprep.subr.mxu0 %v76
    %120 = vmatpush1.msra.mxu0 %v75
    %121 = vmatprep.subr.mxu0 %v74
    %122 = vmatpush1.msra.mxu0 %v73
    %123 = vmatprep.subr.mxu0 %v72
    %124 = vmatpush1.msra.mxu0 %v71
    %125 = vmatprep.subr.mxu0 %v70
    %126 = vmatpush1.msra.mxu0 %v69
    %127 = vmatprep.subr.mxu0 %v68
    %128 = vmatpush1.msra.mxu0 %v67
    %129 = vmatprep.subr.mxu0 %v66
    %130 = vmatpush1.msra.mxu0 %v65
    %131 = vmatprep.subr.mxu0 0.0
    %132 = vmatpush2.msra.mxu0 0.0
    %133 = vmatprep.subr.mxu0 0.0
    %134 = vmatpush2.msra.mxu0 0.0
    %135 = vmatprep.subr.mxu0 0.0
    %136 = vmatpush2.msra.mxu0 0.0
    %137 = vmatprep.subr.mxu0 0.0
    %138 = vmatpush2.msra.mxu0 0.0
    %139 = vmatprep.subr.mxu0 0.0
    %140 = vmatpush2.msra.mxu0 0.0
    %141 = vmatprep.subr.mxu0 0.0
    %142 = vmatpush2.msra.mxu0 0.0
    %143 = vmatprep.subr.mxu0 0.0
    %144 = vmatpush2.msra.mxu0 0.0
    %145 = vmatprep.subr.mxu0 0.0
    %146 = vmatpush2.msra.mxu0 0.0
    %147 = vmatprep.subr.mxu0 0.0
    %148 = vmatpush2.msra.mxu0 0.0
    %149 = vmatprep.subr.mxu0 0.0
    %150 = vmatpush2.msra.mxu0 0.0
    %151 = vmatprep.subr.mxu0 0.0
    %152 = vmatpush2.msra.mxu0 0.0
    %153 = vmatprep.subr.mxu0 0.0
    %154 = vmatpush2.msra.mxu0 0.0
    %155 = vmatprep.subr.mxu0 0.0
    %156 = vmatpush2.msra.mxu0 0.0
    %157 = vmatprep.subr.mxu0 0.0
    %158 = vmatpush2.msra.mxu0 0.0
    %159 = vmatprep.subr.mxu0 0.0
    %160 = vmatpush2.msra.mxu0 0.0
    %161 = vmatprep.subr.mxu0 0.0
    %162 = vmatpush2.msra.mxu0 0.0
    %163 = vmatprep.mubr.f32.mxu0 0.0
    %164 = vmatmul.mubr.f32.gmra.mxu0 %v98
    %v165 = vpop.f32.mrf.mxu0
    %v166 = vadd.f32 0.0, %v165
    %v167 = vpop.f32.mrf.mxu0
    %v168 = vadd.f32 0.0, %v167
    %169 = vdwg.mxu0
    %170 = vst [vmem:[#allocation7] sm:$0xff] %v166
    %171 = vst [vmem:[#allocation7 + $0x8] sm:$0xff] %v168
    // Predicated region
    $region18: #{tpu_custom_call.1} parent=1 // pred_check
      _
    $region19: #{tpu_custom_call.1} parent=1 // pred_check_branch
      %173 = sbr.rel (0) target = $region21
    $region20: #{tpu_custom_call.1} parent=1 // pred_region
      %s175 = ssub.s32 256, 256
      %176 = vsyncadd [#allocation4], %s175
      %s178 = sshll.u32 [#allocation7], 4
      %s179 = int_to_ptr.vmem [resolvable:$true] %s178
      %181 = dma.vmem_to_hbm [thread:$0]  %s179, 256, %s2, [#allocation4]
    $region21: #{tpu_custom_call.1} parent=1 // pred_fallthru
      _
    // Predicated region
    $region22: #{tpu_custom_call.1} parent=1 // pred_check
      _
    $region23: #{tpu_custom_call.1} parent=1 // pred_check_branch
      %183 = sbr.rel (0) target = $region25
    $region24: #{tpu_custom_call.1} parent=1 // pred_region
      %184 = dma.done [#allocation4], 256
    $region25: #{tpu_custom_call.1} parent=1 // pred_fallthru
      _
    %185 = vsyncpa [#allocation3], 1
    %186 = vsyncpa [#allocation6], 1
    %187 = vsyncpa [#allocation4], 1

</llo_original>
